<compile_context>
chip_gen: v7x
topology: tpu7x:2x2x1
jax: 0.10.0
libtpu: 0.0.40
codegen_flags: <defaults>
</compile_context>

<pallas_src>
import functools

import jax
import jax.numpy as jnp
from jax.experimental import pallas as pl
from jax.experimental.pallas import tpu as pltpu

_LANES = 128                       # vreg lane width
_TILE_ROWS = 2048                  # (2048, 128) f32 tile = 1 MiB
_MAX_SINGLE_BLOCK_ELEMS = 1024 * 1024   # 1M f32 elems: 4 MiB in + 4 MiB out
_SINGLE_BLOCK_VMEM_BYTES = 32 * 1024 * 1024


# ---------------------------------------------------------------------------
# Kernels
# ---------------------------------------------------------------------------
def _softmax_single_block_kernel(x_ref, o_ref):
    """Whole (rows, 128) slab resident in VMEM -> one-pass stable softmax."""
    x = x_ref[...].astype(jnp.float32)
    m = jnp.max(x)                               # global max (scalar)
    e = jnp.exp(x - m)                           # EUP exp; -inf padding -> 0
    s = jnp.sum(e).reshape(1, 1)                 # global sum
    inv = pl.reciprocal(s, approx=False)         # one reciprocal, then VALU mul
    o_ref[...] = (e * inv).astype(o_ref.dtype)


def _partial_reduce_kernel(x_ref, m_ref, s_ref, *, total_rows, tile_rows,
                           ragged):
    """Pass 1 (parallel): per-tile max and sum-of-exp.

    Each grid step writes its own (8, 128) block (the scalar broadcast into a
    full aligned block so no sub-(8,128) output tiles are needed).  The ragged
    last tile is masked against the static row count; out-of-bounds rows read
    garbage but are forced to -inf before the reduction.
    """
    i = pl.program_id(0)
    x = x_ref[...].astype(jnp.float32)

    if ragged:
        row = jax.lax.broadcasted_iota(jnp.int32, x.shape, 0) + i * tile_rows
        x = jnp.where(row < total_rows, x, -jnp.inf)

    m_i = jnp.max(x)                                       # scalar, per tile
    # Guard: a tile of all -inf must give s_i = 0, not NaN.
    m_safe = jnp.where(m_i == -jnp.inf, jnp.float32(0.0), m_i)
    s_i = jnp.sum(jnp.exp(x - m_safe))

    m_ref[...] = jnp.broadcast_to(m_i.reshape(1, 1), m_ref.shape)
    s_ref[...] = jnp.broadcast_to(s_i.reshape(1, 1), s_ref.shape)


def _normalize_kernel(c_ref, x_ref, o_ref):
    """Pass 2: out = exp(x - c), c = m_global + log(s_global) from SMEM.

    Out-of-bounds rows of the ragged last block produce garbage values whose
    writes Pallas drops; in-bounds rows are exact.
    """
    c = c_ref[0]                                           # scalar from SMEM
    x = x_ref[...].astype(jnp.float32)
    o_ref[...] = jnp.exp(x - c).astype(o_ref.dtype)


# ---------------------------------------------------------------------------
# Wrapper
# ---------------------------------------------------------------------------
def softmax_stable(x: jax.Array,
                   *,
                   max_single_block_elems: int = _MAX_SINGLE_BLOCK_ELEMS,
                   tile_rows: int = _TILE_ROWS) -> jax.Array:
    """Global stable softmax; semantics identical to the PyTorch module."""
    orig_shape = x.shape
    orig_dtype = x.dtype
    n = x.size
    flat = x.reshape(-1)

    rows = -(-n // _LANES)                       # ceil(n / 128)
    padded_n = rows * _LANES
    lane_pad = padded_n - n                      # <= 127 elements
    if lane_pad:
        # exp(-inf)=0 and -inf can never be the max -> semantics unchanged.
        flat = jnp.pad(flat, (0, lane_pad), constant_values=-jnp.inf)
    x2 = flat.reshape(rows, _LANES)              # lane-dense slab

    if padded_n <= max_single_block_elems or rows <= 8:
        # -------- single-block fast path (no grid, no pipelining) ----------
        out2 = pl.pallas_call(
            _softmax_single_block_kernel,
            out_shape=jax.ShapeDtypeStruct((rows, _LANES), orig_dtype),
            compiler_params=pltpu.CompilerParams(
                vmem_limit_bytes=_SINGLE_BLOCK_VMEM_BYTES),
        )(x2)
    else:
        # ------------------ tiled two-pass path (large inputs) -------------
        # Clamp the tile so its sublane extent never exceeds the slab and
        # stays a multiple of 8.
        tile_rows = max(8, (min(tile_rows, rows) // 8) * 8)
        n_tiles = -(-rows // tile_rows)
        ragged = (rows % tile_rows) != 0

        # Pass 1: independent per-tile (max, sum-of-exp) partial reductions.
        reduce_kernel = functools.partial(
            _partial_reduce_kernel,
            total_rows=rows, tile_rows=tile_rows, ragged=ragged)
        part_m, part_s = pl.pallas_call(
            reduce_kernel,
            out_shape=(jax.ShapeDtypeStruct((n_tiles * 8, _LANES), jnp.float32),
                       jax.ShapeDtypeStruct((n_tiles * 8, _LANES), jnp.float32)),
            grid=(n_tiles,),
            in_specs=[pl.BlockSpec((tile_rows, _LANES), lambda i: (i, 0))],
            out_specs=(pl.BlockSpec((8, _LANES), lambda i: (i, 0)),
                       pl.BlockSpec((8, _LANES), lambda i: (i, 0))),
            compiler_params=pltpu.CompilerParams(
                dimension_semantics=("parallel",)),
        )(x2)

        # Tiny combine over n_tiles scalars (plain XLA ops).
        m_i = part_m.reshape(n_tiles, -1)[:, 0]
        s_i = part_s.reshape(n_tiles, -1)[:, 0]
        m_g = jnp.max(m_i)
        s_g = jnp.sum(s_i * jnp.exp(m_i - m_g))
        c = (m_g + jnp.log(s_g)).astype(jnp.float32).reshape(1)

        # Pass 2: elementwise exp(x - c); c lives in SMEM, tiles are
        # independent -> "parallel" (both v7x TensorCores).
        out2 = pl.pallas_call(
            _normalize_kernel,
            out_shape=jax.ShapeDtypeStruct((rows, _LANES), orig_dtype),
            grid=(n_tiles,),
            in_specs=[pl.BlockSpec(memory_space=pltpu.MemorySpace.SMEM),
                      pl.BlockSpec((tile_rows, _LANES), lambda i: (i, 0))],
            out_specs=pl.BlockSpec((tile_rows, _LANES), lambda i: (i, 0)),
            compiler_params=pltpu.CompilerParams(
                dimension_semantics=("parallel",)),
        )(c, x2)

    out_flat = out2.reshape(-1)
    if lane_pad:
        out_flat = out_flat[:n]
    return out_flat.reshape(orig_shape)


# ---------------------------------------------------------------------------
# Self-test
# ---------------------------------------------------------------------------
def _reference(x):
    e = jnp.exp(x - jnp.max(x))
    return e / jnp.sum(e)


if __name__ == "__main__":
    key = jax.random.PRNGKey(0)
    k1, k2, k3, k4 = jax.random.split(key, 4)

    # 1) Small shape consistent with the module (seq=8, hidden=32):
    #    single-block fast path, n is a multiple of 128 -> zero padding copies.
    x_small = jax.random.normal(k1, (8, 32), dtype=jnp.float32) * 3.0
    out_small = jax.block_until_ready(softmax_stable(x_small))
    ref_small = _reference(x_small)
    assert out_small.shape == x_small.shape and out_small.dtype == x_small.dtype
    assert jnp.allclose(out_small, ref_small, atol=2e-6, rtol=1e-5)
    assert jnp.allclose(jnp.sum(out_small), 1.0, atol=1e-5)

    # 2) Size NOT a multiple of 128 -> exercises the tiny -inf lane pad.
    x_odd = jax.random.normal(k2, (7, 33), dtype=jnp.float32) * 3.0
    out_odd = jax.block_until_ready(softmax_stable(x_odd))
    ref_odd = _reference(x_odd)
    assert out_odd.shape == x_odd.shape
    assert jnp.allclose(out_odd, ref_odd, atol=2e-6, rtol=1e-5)

    # 3) Forced tiled two-pass path with a ragged last tile (600 rows,
    #    tile_rows=256 -> 3 tiles, last tile has 88 valid rows): exercises the
    #    in-kernel row mask and dropped out-of-bounds writes.
    x_big = jax.random.normal(k3, (256, 300), dtype=jnp.float32) * 3.0
    out_big = jax.block_until_ready(
        softmax_stable(x_big, max_single_block_elems=0, tile_rows=256))
    ref_big = _reference(x_big)
    assert out_big.shape == x_big.shape and out_big.dtype == x_big.dtype
    assert jnp.allclose(out_big, ref_big, atol=2e-6, rtol=1e-5)
    assert jnp.allclose(jnp.sum(out_big), 1.0, atol=1e-4)

    # 4) Tiled path at the default (2048, 128) tile with a ragged last tile
    #    (rows=3072 -> 2 tiles, last tile 1024 valid rows).
    x_big2 = jax.random.normal(k4, (768, 512), dtype=jnp.float32) * 3.0
    out_big2 = jax.block_until_ready(
        softmax_stable(x_big2, max_single_block_elems=0))
    ref_big2 = _reference(x_big2)
    assert jnp.allclose(out_big2, ref_big2, atol=2e-6, rtol=1e-5)
    assert jnp.allclose(jnp.sum(out_big2), 1.0, atol=1e-4)

    print("KERNEL_OK")
</pallas_src>

<mosaic_0001>
module attributes {stable_mosaic.version = 11 : i64} {
  func.func @_softmax_single_block_kernel(%arg0: memref<2x128xf32, #tpu.memory_space<vmem>>, %arg1: memref<2x128xf32, #tpu.memory_space<vmem>>) attributes {dimension_semantics = [], scalar_prefetch = 0 : i64, scratch_operands = 0 : i64, tpu.core_type = #tpu.core_type<tc>} {
    %c0 = arith.constant 0 : index
    %c0_0 = arith.constant 0 : index
    %0 = vector.load %arg0[%c0, %c0_0] : memref<2x128xf32, #tpu.memory_space<vmem>>, vector<2x128xf32>
    %1 = vector.shape_cast %0 : vector<2x128xf32> to vector<1x2x128xf32>
    %cst = arith.constant dense<0xFF800000> : vector<1xf32>
    %2 = vector.multi_reduction <maximumf>, %1, %cst [1, 2] : vector<1x2x128xf32> to vector<1xf32>
    %3 = vector.shape_cast %2 : vector<1xf32> to vector<1x1x1xf32>
    %4 = vector.extract %3[0, 0, 0] : f32 from vector<1x1x1xf32>
    %5 = vector.broadcast %4 : f32 to vector<2x128xf32>
    %6 = arith.subf %0, %5 : vector<2x128xf32>
    %7 = math.exp %6 : vector<2x128xf32>
    %8 = vector.shape_cast %7 : vector<2x128xf32> to vector<1x2x128xf32>
    %cst_1 = arith.constant dense<0.000000e+00> : vector<1xf32>
    %9 = vector.multi_reduction <add>, %8, %cst_1 [1, 2] : vector<1x2x128xf32> to vector<1xf32>
    %10 = vector.shape_cast %9 : vector<1xf32> to vector<1x1x1xf32>
    %11 = vector.extract %10[0, 0, 0] : f32 from vector<1x1x1xf32>
    %12 = vector.broadcast %11 : f32 to vector<1x1xf32>
    %13 = tpu.reciprocal %12 : vector<1x1xf32> -> vector<1x1xf32>
    %14 = vector.broadcast %13 : vector<1x1xf32> to vector<2x128xf32>
    %15 = arith.mulf %7, %14 : vector<2x128xf32>
    %c0_2 = arith.constant 0 : index
    %c0_3 = arith.constant 0 : index
    %16 = vector.load %arg1[%c0_2, %c0_3] : memref<2x128xf32, #tpu.memory_space<vmem>>, vector<2x128xf32>
    tpu.vector_store %arg1[%c0_2, %c0_3], %15 {strides = array<i32>} : memref<2x128xf32, #tpu.memory_space<vmem>>, vector<2x128xf32>,
    return
  }
}

</mosaic_0001>

<llo_original>
// kernel: tpu_custom_call.1
$region0: #{tpu_custom_call.1}
  #allocation0 [shape = 'u32[]', space=smem, size = 0x4, offset = 0x4, fixed_abs, tag = 'smem constant byte address 0x4 - core index']
  #allocation1 [shape = 'u32[144,128]{1,0:T(1,128)}', space=vmem, size = 0x12000, scoped, tag = 'internal scratch']
  %s0 = inlined_call_operand.hbm [shape: f32[2,128], index: 0, kind: input, shape index: {}]
  %s1 = inlined_call_operand.hbm [shape: f32[2,128], index: 1, kind: output, shape index: {}]
  %s2 = sld [smem:[#allocation0]]
  $region18: #{tpu_custom_call.1} parent=0
    _
  %s4 = ssub.s32 1, %s2
  %s5 = scalar_select 0, %s4, %s2
  $region1: #{tpu_custom_call.1} parent=0
    #allocation2 [shape = 'u8[1024]{0}', space=vmem, size = 0x400, scoped, tag = 'input window, operand 0, single buffered']
    #allocation3 [shape = 's32[1]{0}', space=sflag, size = 0x4, scoped, tag = 'scoped memory for tpu_custom_call.1']
    #allocation4 [shape = 's32[1]{0}', space=sflag, size = 0x4, scoped, tag = 'scoped memory for tpu_custom_call.1']
    #allocation5 [shape = 'u8[1024]{0}', space=vmem, size = 0x400, scoped, tag = 'output window, operand 0, single buffered']
    %6 = vsyncpa [#allocation3], 0
    %7 = vsyncpa [#allocation4], 0
    // Predicated region
    $region2: #{tpu_custom_call.1} parent=1 // pred_check
      _
    $region3: #{tpu_custom_call.1} parent=1 // pred_check_branch
      %9 = sbr.rel (0) target = $region5
    $region4: #{tpu_custom_call.1} parent=1 // pred_region
      %s11 = ssub.s32 32, 32
      %12 = vsyncadd [#allocation3], %s11
      %s14 = sshll.u32 [#allocation2], 4
      %s15 = int_to_ptr.vmem [resolvable:$true] %s14
      %17 = dma.hbm_to_vmem [thread:$0]  %s0, 32, %s15, [#allocation3]
    $region5: #{tpu_custom_call.1} parent=1 // pred_fallthru
      _
    // Predicated region
    $region6: #{tpu_custom_call.1} parent=1 // pred_check
      _
    $region7: #{tpu_custom_call.1} parent=1 // pred_check_branch
      %19 = sbr.rel (0) target = $region9
    $region8: #{tpu_custom_call.1} parent=1 // pred_region
      %20 = dma.done [#allocation3], 32
    $region9: #{tpu_custom_call.1} parent=1 // pred_fallthru
      _
    %v21 = vld [vmem:[#allocation2] sm:$0x3]
    %vm22 = vcmask 1041408
    %v23 = vsel %vm22, %v21, -inf
    %24 = vmax.xlane.f32.xlu0 %v23
    %v25 = vpop.xlane.xlu0 %24
    %v26 = vrot.slane %v25, 4
    %v27 = vmax.f32 %v25, %v26
    %v28 = vrot.slane %v27, 2
    %v29 = vmax.f32 %v27, %v28
    %v30 = vrot.slane %v29, 1
    %v31 = vmax.f32 %v29, %v30
    %s32 = vtos %v31
    %v33 = vstv %s32
    %v34 = vsub.f32 %v21, %v33
    %v35 = vmul.f32 %v34, 1.442695
    %v36 = vpow.pop %v35
    %v37 = vsel %vm22, %v36, 0.0
    %38 = vadd.xlane.f32.xlu0 %v37
    %v39 = vpop.xlane.xlu0 %38
    %v40 = vrot.slane %v39, 4
    %v41 = vadd.f32 %v39, %v40
    %v42 = vrot.slane %v41, 2
    %v43 = vadd.f32 %v41, %v42
    %v44 = vrot.slane %v43, 1
    %v45 = vadd.f32 %v43, %v44
    %s46 = vtos %v45
    %v47 = vstv %s46
    %v48 = vrcp.pop %v47
    %v49 = vmul.f32 %v36, %v48
    %50 = vst [vmem:[#allocation5] sm:$0x3] %v49
    // Predicated region
    $region10: #{tpu_custom_call.1} parent=1 // pred_check
      _
    $region11: #{tpu_custom_call.1} parent=1 // pred_check_branch
      %52 = sbr.rel (0) target = $region13
    $region12: #{tpu_custom_call.1} parent=1 // pred_region
      %s54 = ssub.s32 32, 32
      %55 = vsyncadd [#allocation4], %s54
      %s57 = sshll.u32 [#allocation5], 4
      %s58 = int_to_ptr.vmem [resolvable:$true] %s57
      %60 = dma.vmem_to_hbm [thread:$0]  %s58, 32, %s1, [#allocation4]
    $region13: #{tpu_custom_call.1} parent=1 // pred_fallthru
      _
    // Predicated region
    $region14: #{tpu_custom_call.1} parent=1 // pred_check
      _
    $region15: #{tpu_custom_call.1} parent=1 // pred_check_branch
      %62 = sbr.rel (0) target = $region17
    $region16: #{tpu_custom_call.1} parent=1 // pred_region
      %63 = dma.done [#allocation4], 32
    $region17: #{tpu_custom_call.1} parent=1 // pred_fallthru
      _
    %64 = vsyncpa [#allocation3], 1
    %65 = vsyncpa [#allocation4], 1

</llo_original>
